<compile_context>
chip_gen: v5e
topology: v5e:2x2
jax: 0.10.0
libtpu: 0.0.40
codegen_flags: <defaults>
</compile_context>

<pallas_src>
import jax
import jax.numpy as jnp
import numpy as np
from jax import lax
from jax.experimental import pallas as pl
from jax.experimental.pallas import tpu as pltpu


# ----------------------------------------------------------------------------
# Pallas kernel
# ----------------------------------------------------------------------------
def _upconv_kernel(x_ref, w_ref, b_ref, o_ref):
    # x_ref: (1, Cin, TILE)    chunk of the flattened NCHW input (spatial on lanes)
    # w_ref: (4*Cout, Cin)     rows ordered (a, b, co), a/b = 2x2 kernel tap
    # b_ref: (4*Cout, 1)
    # o_ref: (1, 4*Cout, TILE)
    acc = jnp.dot(w_ref[...], x_ref[0], preferred_element_type=jnp.float32)
    o_ref[0] = (acc + b_ref[...]).astype(o_ref.dtype)


def _pick_spatial_tile(hw, max_tile=2048):
    """Largest multiple-of-128 divisor of hw (<= max_tile), preferring >=2 grid steps."""
    divs = [d for d in range(128, min(hw, max_tile) + 1, 128) if hw % d == 0]
    if not divs:
        return hw                       # full extent is always a legal block shape
    multi = [d for d in divs if hw // d >= 2]
    return max(multi) if multi else max(divs)


# ----------------------------------------------------------------------------
# Wrapper: ConvTranspose2d(k=2, s=2) on NCHW tensors (PyTorch semantics)
# ----------------------------------------------------------------------------
def upconv2x2(x_nchw, w_iohw, bias):
    """x: (N, Cin, H, W);  w: (Cin, Cout, 2, 2) torch layout;  bias: (Cout,)."""
    N, Cin, H, W = x_nchw.shape
    Cout = w_iohw.shape[1]
    HW = H * W
    TILE = _pick_spatial_tile(HW)

    x2 = x_nchw.reshape(N, Cin, HW)                          # free reshape, no transpose
    # wmat[(a*2+b)*Cout + co, ci] = w[ci, co, a, b]
    wmat = jnp.transpose(w_iohw, (2, 3, 1, 0)).reshape(4 * Cout, Cin)
    bmat = jnp.tile(bias, 4).reshape(4 * Cout, 1)

    y = pl.pallas_call(
        _upconv_kernel,
        out_shape=jax.ShapeDtypeStruct((N, 4 * Cout, HW), jnp.float32),
        grid=(N, HW // TILE),
        in_specs=[
            pl.BlockSpec((1, Cin, TILE), lambda n, t: (n, 0, t)),
            pl.BlockSpec((4 * Cout, Cin), lambda n, t: (0, 0)),
            pl.BlockSpec((4 * Cout, 1), lambda n, t: (0, 0)),
        ],
        out_specs=pl.BlockSpec((1, 4 * Cout, TILE), lambda n, t: (n, 0, t)),
        compiler_params=pltpu.CompilerParams(
            dimension_semantics=("parallel", "parallel"),
            vmem_limit_bytes=32 * 1024 * 1024,
        ),
    )(x2, wmat, bmat)

    # Single fused relayout: (n, (a,b,co), h*W+w) -> (n, co, 2h+a, 2w+b)
    y = y.reshape(N, 2, 2, Cout, H, W)
    y = jnp.transpose(y, (0, 3, 4, 1, 5, 2))                 # (N, Cout, H, 2, W, 2)
    return y.reshape(N, Cout, 2 * H, 2 * W)


# ----------------------------------------------------------------------------
# Pure-JAX reference (for correctness check)
# ----------------------------------------------------------------------------
def ref_upconv2x2(x_nchw, w_iohw, bias):
    N, Cin, H, W = x_nchw.shape
    Cout = w_iohw.shape[1]
    y = jnp.einsum('nihw,ioab->nohawb', x_nchw, w_iohw,
                   precision=lax.Precision.HIGHEST)
    return y.reshape(N, Cout, 2 * H, 2 * W) + bias[None, :, None, None]


# ----------------------------------------------------------------------------
# Demo / self-check
# ----------------------------------------------------------------------------
if __name__ == "__main__":
    key = jax.random.PRNGKey(0)
    kx, kw, kb = jax.random.split(key, 3)

    input_ch, output_ch = 64, 32          # module defaults: UpConv(64, 32, bias=True)
    N, H, W = 2, 16, 16

    x = jax.random.normal(kx, (N, input_ch, H, W), jnp.float32)
    w = jax.random.normal(kw, (input_ch, output_ch, 2, 2), jnp.float32) / np.sqrt(input_ch * 4)
    b = jax.random.normal(kb, (output_ch,), jnp.float32) * 0.01

    out = jax.block_until_ready(jax.jit(upconv2x2)(x, w, b))
    assert out.shape == (N, output_ch, 2 * H, 2 * W), out.shape

    ref = jax.block_until_ready(jax.jit(ref_upconv2x2)(x, w, b))
    np.testing.assert_allclose(np.asarray(out), np.asarray(ref), rtol=2e-3, atol=2e-3)
    print("KERNEL_OK")
</pallas_src>

<mosaic_0001>
module attributes {stable_mosaic.version = 11 : i64} {
  func.func @_upconv_kernel(%arg0: i32, %arg1: i32, %arg2: memref<1x64x128xf32, #tpu.memory_space<vmem>>, %arg3: memref<128x64xf32, #tpu.memory_space<vmem>>, %arg4: memref<128x1xf32, #tpu.memory_space<vmem>>, %arg5: memref<1x128x128xf32, #tpu.memory_space<vmem>>) attributes {dimension_semantics = [#tpu.dimension_semantics<parallel>, #tpu.dimension_semantics<parallel>], iteration_bounds = array<i64: 2, 2>, scalar_prefetch = 0 : i64, scratch_operands = 0 : i64, tpu.core_type = #tpu.core_type<tc>, window_params = [{transform_indices = @transform_0, window_bounds = array<i64: 1, 64, 128>}, {pipeline_mode = #tpu.pipeline_mode<synchronous>, transform_indices = @transform_1, window_bounds = array<i64: 128, 64>}, {pipeline_mode = #tpu.pipeline_mode<synchronous>, transform_indices = @transform_2, window_bounds = array<i64: 128, 1>}, {transform_indices = @transform_3, window_bounds = array<i64: 1, 128, 128>}]} {
    %c0 = arith.constant 0 : index
    %c0_0 = arith.constant 0 : index
    %0 = vector.load %arg3[%c0, %c0_0] : memref<128x64xf32, #tpu.memory_space<vmem>>, vector<128x64xf32>
    %c0_1 = arith.constant 0 : index
    %c0_2 = arith.constant 0 : index
    %c0_3 = arith.constant 0 : index
    %1 = vector.load %arg2[%c0_1, %c0_2, %c0_3] : memref<1x64x128xf32, #tpu.memory_space<vmem>>, vector<1x64x128xf32>
    %2 = vector.shape_cast %1 : vector<1x64x128xf32> to vector<64x128xf32>
    %cst = arith.constant dense<0.000000e+00> : vector<128x128xf32>
    %3 = tpu.matmul %0, %2, %cst {dimension_numbers = #tpu.dot_dimension_numbers<[1], [0], [0], [1], [0, 0, 1, 1], [], []>} : vector<128x64xf32>, vector<64x128xf32>, vector<128x128xf32> -> vector<128x128xf32>
    %c0_4 = arith.constant 0 : index
    %c0_5 = arith.constant 0 : index
    %4 = vector.load %arg4[%c0_4, %c0_5] : memref<128x1xf32, #tpu.memory_space<vmem>>, vector<128x1xf32>
    %5 = vector.broadcast %4 : vector<128x1xf32> to vector<128x128xf32>
    %6 = arith.addf %3, %5 : vector<128x128xf32>
    %c0_6 = arith.constant 0 : index
    %c0_7 = arith.constant 0 : index
    %c0_8 = arith.constant 0 : index
    %7 = vector.load %arg5[%c0_6, %c0_7, %c0_8] : memref<1x128x128xf32, #tpu.memory_space<vmem>>, vector<1x128x128xf32>
    %8 = vector.shape_cast %7 : vector<1x128x128xf32> to vector<128x128xf32>
    %9 = vector.shape_cast %6 : vector<128x128xf32> to vector<1x128x128xf32>
    tpu.vector_store %arg5[%c0_6, %c0_7, %c0_8], %9 {strides = array<i32>} : memref<1x128x128xf32, #tpu.memory_space<vmem>>, vector<1x128x128xf32>,
    return
  }
  func.func @transform_0(%arg0: i32, %arg1: i32) -> (i32, i32, i32) {
    %c0_i32 = arith.constant 0 : i32
    %c0_i32_0 = arith.constant 0 : i32
    return %arg0, %c0_i32, %arg1 : i32, i32, i32
  }
  func.func @transform_1(%arg0: i32, %arg1: i32) -> (i32, i32) {
    %c0_i32 = arith.constant 0 : i32
    %c0_i32_0 = arith.constant 0 : i32
    %c0_i32_1 = arith.constant 0 : i32
    return %c0_i32, %c0_i32_0 : i32, i32
  }
  func.func @transform_2(%arg0: i32, %arg1: i32) -> (i32, i32) {
    %c0_i32 = arith.constant 0 : i32
    %c0_i32_0 = arith.constant 0 : i32
    %c0_i32_1 = arith.constant 0 : i32
    return %c0_i32, %c0_i32_0 : i32, i32
  }
  func.func @transform_3(%arg0: i32, %arg1: i32) -> (i32, i32, i32) {
    %c0_i32 = arith.constant 0 : i32
    %c0_i32_0 = arith.constant 0 : i32
    return %arg0, %c0_i32, %arg1 : i32, i32, i32
  }
}

</mosaic_0001>

<llo_original>
// kernel: tile.8
$region0: #{tile.8}
  #allocation0 [shape = 's32[1]{0}', space=sflag, size = 0x4, scoped, tag = 'scoped memory for tile.8']
  %s0 = inlined_call_operand.vmem [shape: f32[32], index: 0, kind: input, shape index: {}]
  %s1 = inlined_call_operand.vmem [shape: f32[4,32], index: 1, kind: output, shape index: {}]
  // Predicated region
  $region2: #{tile.8} parent=0 // pred_check
    _
  $region3: #{tile.8} parent=0 // pred_check_branch
    %3 = sbr.rel (0) target = $region5
  $region4: #{tile.8} parent=0 // pred_region
    _
  $region5: #{tile.8} parent=0 // pred_fallthru
    _
  %v4 = vld [vmem:[%s0] ss:$0 sm:$0xff]
  %5 = vst [vmem:[%s1] sm:$0xf] %v4

// kernel: tile.0
$region0: #{tile.0}
  %s0 = inlined_call_operand.vmem [shape: f32[4,32], index: 0, kind: input, shape index: {}]
  %s1 = inlined_call_operand.vmem [shape: f32[128,1], index: 1, kind: output, shape index: {}]
  $region1: #{tile.0} parent=0
    #allocation0 [shape = 'u8[4096]{0}', space=vmem, size = 0x1000, scoped, tag = 'scoped mem for input reshape']
    %s3 = ssub.s32 16, 1
    %v4 = vld [vmem:[%s0] sm:%s3]
    %5 = vst [vmem:[#allocation0] sm:%s3] %v4
    %v6 = vld [vmem:[#allocation0] sm:$0xf]
    %vm7 = vcmask 7168
    %8 = vst.msk [vmem:[%s1] sm:$0x1] %vm7, %v6
    %s9 = scalar_lea.vmem %s1, 31
    %10 = vst.msk [vmem:[%s9] sm:$0x2] %vm7, %v6
    %s11 = scalar_lea.vmem %s1, 62
    %12 = vst.msk [vmem:[%s11] sm:$0x4] %vm7, %v6
    %s13 = scalar_lea.vmem %s1, 93
    %14 = vst.msk [vmem:[%s13] sm:$0x8] %vm7, %v6
    %v15 = vld [vmem:[#allocation0] sm:$0xf]
    %16 = vrot.lane.b32.xlu0 %v15, 127
    %v17 = vpop.permute.xlu0 %16
    %vm18 = vcmask 7168
    %s19 = scalar_lea.vmem %s1, 1
    %20 = vst.msk [vmem:[%s19] sm:$0x1] %vm18, %v17
    %s21 = scalar_lea.vmem %s1, 32
    %22 = vst.msk [vmem:[%s21] sm:$0x2] %vm18, %v17
    %s23 = scalar_lea.vmem %s1, 63
    %24 = vst.msk [vmem:[%s23] sm:$0x4] %vm18, %v17
    %s25 = scalar_lea.vmem %s1, 94
    %26 = vst.msk [vmem:[%s25] sm:$0x8] %vm18, %v17
    %v27 = vld [vmem:[#allocation0] sm:$0xf]
    %28 = vrot.lane.b32.xlu0 %v27, 126
    %v29 = vpop.permute.xlu0 %28
    %vm30 = vcmask 7168
    %s31 = scalar_lea.vmem %s1, 2
    %32 = vst.msk [vmem:[%s31] sm:$0x1] %vm30, %v29
    %s33 = scalar_lea.vmem %s1, 33
    %34 = vst.msk [vmem:[%s33] sm:$0x2] %vm30, %v29
    %s35 = scalar_lea.vmem %s1, 64
    %36 = vst.msk [vmem:[%s35] sm:$0x4] %vm30, %v29
    %s37 = scalar_lea.vmem %s1, 95
    %38 = vst.msk [vmem:[%s37] sm:$0x8] %vm30, %v29
    %v39 = vld [vmem:[#allocation0] sm:$0xf]
    %40 = vrot.lane.b32.xlu0 %v39, 125
    %v41 = vpop.permute.xlu0 %40
    %vm42 = vcmask 7168
    %s43 = scalar_lea.vmem %s1, 3
    %44 = vst.msk [vmem:[%s43] sm:$0x1] %vm42, %v41
    %s45 = scalar_lea.vmem %s1, 34
    %46 = vst.msk [vmem:[%s45] sm:$0x2] %vm42, %v41
    %s47 = scalar_lea.vmem %s1, 65
    %48 = vst.msk [vmem:[%s47] sm:$0x4] %vm42, %v41
    %s49 = scalar_lea.vmem %s1, 96
    %50 = vst.msk [vmem:[%s49] sm:$0x8] %vm42, %v41
    %v51 = vld [vmem:[#allocation0] sm:$0xf]
    %52 = vrot.lane.b32.xlu0 %v51, 124
    %v53 = vpop.permute.xlu0 %52
    %vm54 = vcmask 7168
    %s55 = scalar_lea.vmem %s1, 4
    %56 = vst.msk [vmem:[%s55] sm:$0x1] %vm54, %v53
    %s57 = scalar_lea.vmem %s1, 35
    %58 = vst.msk [vmem:[%s57] sm:$0x2] %vm54, %v53
    %s59 = scalar_lea.vmem %s1, 66
    %60 = vst.msk [vmem:[%s59] sm:$0x4] %vm54, %v53
    %s61 = scalar_lea.vmem %s1, 97
    %62 = vst.msk [vmem:[%s61] sm:$0x8] %vm54, %v53
    %v63 = vld [vmem:[#allocation0] sm:$0xf]
    %64 = vrot.lane.b32.xlu0 %v63, 123
    %v65 = vpop.permute.xlu0 %64
    %vm66 = vcmask 7168
    %s67 = scalar_lea.vmem %s1, 5
    %68 = vst.msk [vmem:[%s67] sm:$0x1] %vm66, %v65
    %s69 = scalar_lea.vmem %s1, 36
    %70 = vst.msk [vmem:[%s69] sm:$0x2] %vm66, %v65
    %s71 = scalar_lea.vmem %s1, 67
    %72 = vst.msk [vmem:[%s71] sm:$0x4] %vm66, %v65
    %s73 = scalar_lea.vmem %s1, 98
    %74 = vst.msk [vmem:[%s73] sm:$0x8] %vm66, %v65
    %v75 = vld [vmem:[#allocation0] sm:$0xf]
    %76 = vrot.lane.b32.xlu0 %v75, 122
    %v77 = vpop.permute.xlu0 %76
    %vm78 = vcmask 7168
    %s79 = scalar_lea.vmem %s1, 6
    %80 = vst.msk [vmem:[%s79] sm:$0x1] %vm78, %v77
    %s81 = scalar_lea.vmem %s1, 37
    %82 = vst.msk [vmem:[%s81] sm:$0x2] %vm78, %v77
    %s83 = scalar_lea.vmem %s1, 68
    %84 = vst.msk [vmem:[%s83] sm:$0x4] %vm78, %v77
    %s85 = scalar_lea.vmem %s1, 99
    %86 = vst.msk [vmem:[%s85] sm:$0x8] %vm78, %v77
    %v87 = vld [vmem:[#allocation0] sm:$0xf]
    %88 = vrot.lane.b32.xlu0 %v87, 121
    %v89 = vpop.permute.xlu0 %88
    %vm90 = vcmask 7168
    %s91 = scalar_lea.vmem %s1, 7
    %92 = vst.msk [vmem:[%s91] sm:$0x1] %vm90, %v89
    %s93 = scalar_lea.vmem %s1, 38
    %94 = vst.msk [vmem:[%s93] sm:$0x2] %vm90, %v89
    %s95 = scalar_lea.vmem %s1, 69
    %96 = vst.msk [vmem:[%s95] sm:$0x4] %vm90, %v89
    %s97 = scalar_lea.vmem %s1, 100
    %98 = vst.msk [vmem:[%s97] sm:$0x8] %vm90, %v89
    %v99 = vld [vmem:[#allocation0] sm:$0xf]
    %100 = vrot.lane.b32.xlu0 %v99, 120
    %v101 = vpop.permute.xlu0 %100
    %vm102 = vcmask 7168
    %s103 = scalar_lea.vmem %s1, 8
    %104 = vst.msk [vmem:[%s103] sm:$0x1] %vm102, %v101
    %s105 = scalar_lea.vmem %s1, 39
    %106 = vst.msk [vmem:[%s105] sm:$0x2] %vm102, %v101
    %s107 = scalar_lea.vmem %s1, 70
    %108 = vst.msk [vmem:[%s107] sm:$0x4] %vm102, %v101
    %s109 = scalar_lea.vmem %s1, 101
    %110 = vst.msk [vmem:[%s109] sm:$0x8] %vm102, %v101
    %v111 = vld [vmem:[#allocation0] sm:$0xf]
    %112 = vrot.lane.b32.xlu0 %v111, 119
    %v113 = vpop.permute.xlu0 %112
    %vm114 = vcmask 7168
    %s115 = scalar_lea.vmem %s1, 9
    %116 = vst.msk [vmem:[%s115] sm:$0x1] %vm114, %v113
    %s117 = scalar_lea.vmem %s1, 40
    %118 = vst.msk [vmem:[%s117] sm:$0x2] %vm114, %v113
    %s119 = scalar_lea.vmem %s1, 71
    %120 = vst.msk [vmem:[%s119] sm:$0x4] %vm114, %v113
    %s121 = scalar_lea.vmem %s1, 102
    %122 = vst.msk [vmem:[%s121] sm:$0x8] %vm114, %v113
    %v123 = vld [vmem:[#allocation0] sm:$0xf]
    %124 = vrot.lane.b32.xlu0 %v123, 118
    %v125 = vpop.permute.xlu0 %124
    %vm126 = vcmask 7168
    %s127 = scalar_lea.vmem %s1, 10
    %128 = vst.msk [vmem:[%s127] sm:$0x1] %vm126, %v125
    %s129 = scalar_lea.vmem %s1, 41
    %130 = vst.msk [vmem:[%s129] sm:$0x2] %vm126, %v125
    %s131 = scalar_lea.vmem %s1, 72
    %132 = vst.msk [vmem:[%s131] sm:$0x4] %vm126, %v125
    %s133 = scalar_lea.vmem %s1, 103
    %134 = vst.msk [vmem:[%s133] sm:$0x8] %vm126, %v125
    %v135 = vld [vmem:[#allocation0] sm:$0xf]
    %136 = vrot.lane.b32.xlu0 %v135, 117
    %v137 = vpop.permute.xlu0 %136
    %vm138 = vcmask 7168
    %s139 = scalar_lea.vmem %s1, 11
    %140 = vst.msk [vmem:[%s139] sm:$0x1] %vm138, %v137
    %s141 = scalar_lea.vmem %s1, 42
    %142 = vst.msk [vmem:[%s141] sm:$0x2] %vm138, %v137
    %s143 = scalar_lea.vmem %s1, 73
    %144 = vst.msk [vmem:[%s143] sm:$0x4] %vm138, %v137
    %s145 = scalar_lea.vmem %s1, 104
    %146 = vst.msk [vmem:[%s145] sm:$0x8] %vm138, %v137
    %v147 = vld [vmem:[#allocation0] sm:$0xf]
    %148 = vrot.lane.b32.xlu0 %v147, 116
    %v149 = vpop.permute.xlu0 %148
    %vm150 = vcmask 7168
    %s151 = scalar_lea.vmem %s1, 12
    %152 = vst.msk [vmem:[%s151] sm:$0x1] %vm150, %v149
    %s153 = scalar_lea.vmem %s1, 43
    %154 = vst.msk [vmem:[%s153] sm:$0x2] %vm150, %v149
    %s155 = scalar_lea.vmem %s1, 74
    %156 = vst.msk [vmem:[%s155] sm:$0x4] %vm150, %v149
    %s157 = scalar_lea.vmem %s1, 105
    %158 = vst.msk [vmem:[%s157] sm:$0x8] %vm150, %v149
    %v159 = vld [vmem:[#allocation0] sm:$0xf]
    %160 = vrot.lane.b32.xlu0 %v159, 115
    %v161 = vpop.permute.xlu0 %160
    %vm162 = vcmask 7168
    %s163 = scalar_lea.vmem %s1, 13
    %164 = vst.msk [vmem:[%s163] sm:$0x1] %vm162, %v161
    %s165 = scalar_lea.vmem %s1, 44
    %166 = vst.msk [vmem:[%s165] sm:$0x2] %vm162, %v161
    %s167 = scalar_lea.vmem %s1, 75
    %168 = vst.msk [vmem:[%s167] sm:$0x4] %vm162, %v161
    %s169 = scalar_lea.vmem %s1, 106
    %170 = vst.msk [vmem:[%s169] sm:$0x8] %vm162, %v161
    %v171 = vld [vmem:[#allocation0] sm:$0xf]
    %172 = vrot.lane.b32.xlu0 %v171, 114
    %v173 = vpop.permute.xlu0 %172
    %vm174 = vcmask 7168
    %s175 = scalar_lea.vmem %s1, 14
    %176 = vst.msk [vmem:[%s175] sm:$0x1] %vm174, %v173
    %s177 = scalar_lea.vmem %s1, 45
    %178 = vst.msk [vmem:[%s177] sm:$0x2] %vm174, %v173
    %s179 = scalar_lea.vmem %s1, 76
    %180 = vst.msk [vmem:[%s179] sm:$0x4] %vm174, %v173
    %s181 = scalar_lea.vmem %s1, 107
    %182 = vst.msk [vmem:[%s181] sm:$0x8] %vm174, %v173
    %v183 = vld [vmem:[#allocation0] sm:$0xf]
    %184 = vrot.lane.b32.xlu0 %v183, 113
    %v185 = vpop.permute.xlu0 %184
    %vm186 = vcmask 7168
    %s187 = scalar_lea.vmem %s1, 15
    %188 = vst.msk [vmem:[%s187] sm:$0x1] %vm186, %v185
    %s189 = scalar_lea.vmem %s1, 46
    %190 = vst.msk [vmem:[%s189] sm:$0x2] %vm186, %v185
    %s191 = scalar_lea.vmem %s1, 77
    %192 = vst.msk [vmem:[%s191] sm:$0x4] %vm186, %v185
    %s193 = scalar_lea.vmem %s1, 108
    %194 = vst.msk [vmem:[%s193] sm:$0x8] %vm186, %v185
    %v195 = vld [vmem:[#allocation0] sm:$0xf]
    %196 = vrot.lane.b32.xlu0 %v195, 112
    %v197 = vpop.permute.xlu0 %196
    %vm198 = vcmask 7168
    %s199 = scalar_lea.vmem %s1, 16
    %200 = vst.msk [vmem:[%s199] sm:$0x1] %vm198, %v197
    %s201 = scalar_lea.vmem %s1, 47
    %202 = vst.msk [vmem:[%s201] sm:$0x2] %vm198, %v197
    %s203 = scalar_lea.vmem %s1, 78
    %204 = vst.msk [vmem:[%s203] sm:$0x4] %vm198, %v197
    %s205 = scalar_lea.vmem %s1, 109
    %206 = vst.msk [vmem:[%s205] sm:$0x8] %vm198, %v197
    %v207 = vld [vmem:[#allocation0] sm:$0xf]
    %208 = vrot.lane.b32.xlu0 %v207, 111
    %v209 = vpop.permute.xlu0 %208
    %vm210 = vcmask 7168
    %s211 = scalar_lea.vmem %s1, 17
    %212 = vst.msk [vmem:[%s211] sm:$0x1] %vm210, %v209
    %s213 = scalar_lea.vmem %s1, 48
    %214 = vst.msk [vmem:[%s213] sm:$0x2] %vm210, %v209
    %s215 = scalar_lea.vmem %s1, 79
    %216 = vst.msk [vmem:[%s215] sm:$0x4] %vm210, %v209
    %s217 = scalar_lea.vmem %s1, 110
    %218 = vst.msk [vmem:[%s217] sm:$0x8] %vm210, %v209
    %v219 = vld [vmem:[#allocation0] sm:$0xf]
    %220 = vrot.lane.b32.xlu0 %v219, 110
    %v221 = vpop.permute.xlu0 %220
    %vm222 = vcmask 7168
    %s223 = scalar_lea.vmem %s1, 18
    %224 = vst.msk [vmem:[%s223] sm:$0x1] %vm222, %v221
    %s225 = scalar_lea.vmem %s1, 49
    %226 = vst.msk [vmem:[%s225] sm:$0x2] %vm222, %v221
    %s227 = scalar_lea.vmem %s1, 80
    %228 = vst.msk [vmem:[%s227] sm:$0x4] %vm222, %v221
    %s229 = scalar_lea.vmem %s1, 111
    %230 = vst.msk [vmem:[%s229] sm:$0x8] %vm222, %v221
    %v231 = vld [vmem:[#allocation0] sm:$0xf]
    %232 = vrot.lane.b32.xlu0 %v231, 109
    %v233 = vpop.permute.xlu0 %232
    %vm234 = vcmask 7168
    %s235 = scalar_lea.vmem %s1, 19
    %236 = vst.msk [vmem:[%s235] sm:$0x1] %vm234, %v233
    %s237 = scalar_lea.vmem %s1, 50
    %238 = vst.msk [vmem:[%s237] sm:$0x2] %vm234, %v233
    %s239 = scalar_lea.vmem %s1, 81
    %240 = vst.msk [vmem:[%s239] sm:$0x4] %vm234, %v233
    %s241 = scalar_lea.vmem %s1, 112
    %242 = vst.msk [vmem:[%s241] sm:$0x8] %vm234, %v233
    %v243 = vld [vmem:[#allocation0] sm:$0xf]
    %244 = vrot.lane.b32.xlu0 %v243, 108
    %v245 = vpop.permute.xlu0 %244
    %vm246 = vcmask 7168
    %s247 = scalar_lea.vmem %s1, 20
    %248 = vst.msk [vmem:[%s247] sm:$0x1] %vm246, %v245
    %s249 = scalar_lea.vmem %s1, 51
    %250 = vst.msk [vmem:[%s249] sm:$0x2] %vm246, %v245
    %s251 = scalar_lea.vmem %s1, 82
    %252 = vst.msk [vmem:[%s251] sm:$0x4] %vm246, %v245
    %s253 = scalar_lea.vmem %s1, 113
    %254 = vst.msk [vmem:[%s253] sm:$0x8] %vm246, %v245
    %v255 = vld [vmem:[#allocation0] sm:$0xf]
    %256 = vrot.lane.b32.xlu0 %v255, 107
    %v257 = vpop.permute.xlu0 %256
    %vm258 = vcmask 7168
    %s259 = scalar_lea.vmem %s1, 21
    %260 = vst.msk [vmem:[%s259] sm:$0x1] %vm258, %v257
    %s261 = scalar_lea.vmem %s1, 52
    %262 = vst.msk [vmem:[%s261] sm:$0x2] %vm258, %v257
    %s263 = scalar_lea.vmem %s1, 83
    %264 = vst.msk [vmem:[%s263] sm:$0x4] %vm258, %v257
    %s265 = scalar_lea.vmem %s1, 114
    %266 = vst.msk [vmem:[%s265] sm:$0x8] %vm258, %v257
    %v267 = vld [vmem:[#allocation0] sm:$0xf]
    %268 = vrot.lane.b32.xlu0 %v267, 106
    %v269 = vpop.permute.xlu0 %268
    %vm270 = vcmask 7168
    %s271 = scalar_lea.vmem %s1, 22
    %272 = vst.msk [vmem:[%s271] sm:$0x1] %vm270, %v269
    %s273 = scalar_lea.vmem %s1, 53
    %274 = vst.msk [vmem:[%s273] sm:$0x2] %vm270, %v269
    %s275 = scalar_lea.vmem %s1, 84
    %276 = vst.msk [vmem:[%s275] sm:$0x4] %vm270, %v269
    %s277 = scalar_lea.vmem %s1, 115
    %278 = vst.msk [vmem:[%s277] sm:$0x8] %vm270, %v269
    %v279 = vld [vmem:[#allocation0] sm:$0xf]
    %280 = vrot.lane.b32.xlu0 %v279, 105
    %v281 = vpop.permute.xlu0 %280
    %vm282 = vcmask 7168
    %s283 = scalar_lea.vmem %s1, 23
    %284 = vst.msk [vmem:[%s283] sm:$0x1] %vm282, %v281
    %s285 = scalar_lea.vmem %s1, 54
    %286 = vst.msk [vmem:[%s285] sm:$0x2] %vm282, %v281
    %s287 = scalar_lea.vmem %s1, 85
    %288 = vst.msk [vmem:[%s287] sm:$0x4] %vm282, %v281
    %s289 = scalar_lea.vmem %s1, 116
    %290 = vst.msk [vmem:[%s289] sm:$0x8] %vm282, %v281
    %v291 = vld [vmem:[#allocation0] sm:$0xf]
    %292 = vrot.lane.b32.xlu0 %v291, 104
    %v293 = vpop.permute.xlu0 %292
    %vm294 = vcmask 7168
    %s295 = scalar_lea.vmem %s1, 24
    %296 = vst.msk [vmem:[%s295] sm:$0x1] %vm294, %v293
    %s297 = scalar_lea.vmem %s1, 55
    %298 = vst.msk [vmem:[%s297] sm:$0x2] %vm294, %v293
    %s299 = scalar_lea.vmem %s1, 86
    %300 = vst.msk [vmem:[%s299] sm:$0x4] %vm294, %v293
    %s301 = scalar_lea.vmem %s1, 117
    %302 = vst.msk [vmem:[%s301] sm:$0x8] %vm294, %v293
    %v303 = vld [vmem:[#allocation0] sm:$0xf]
    %304 = vrot.lane.b32.xlu0 %v303, 103
    %v305 = vpop.permute.xlu0 %304
    %vm306 = vcmask 7168
    %s307 = scalar_lea.vmem %s1, 25
    %308 = vst.msk [vmem:[%s307] sm:$0x1] %vm306, %v305
    %s309 = scalar_lea.vmem %s1, 56
    %310 = vst.msk [vmem:[%s309] sm:$0x2] %vm306, %v305
    %s311 = scalar_lea.vmem %s1, 87
    %312 = vst.msk [vmem:[%s311] sm:$0x4] %vm306, %v305
    %s313 = scalar_lea.vmem %s1, 118
    %314 = vst.msk [vmem:[%s313] sm:$0x8] %vm306, %v305
    %v315 = vld [vmem:[#allocation0] sm:$0xf]
    %316 = vrot.lane.b32.xlu0 %v315, 102
    %v317 = vpop.permute.xlu0 %316
    %vm318 = vcmask 7168
    %s319 = scalar_lea.vmem %s1, 26
    %320 = vst.msk [vmem:[%s319] sm:$0x1] %vm318, %v317
    %s321 = scalar_lea.vmem %s1, 57
    %322 = vst.msk [vmem:[%s321] sm:$0x2] %vm318, %v317
    %s323 = scalar_lea.vmem %s1, 88
    %324 = vst.msk [vmem:[%s323] sm:$0x4] %vm318, %v317
    %s325 = scalar_lea.vmem %s1, 119
    %326 = vst.msk [vmem:[%s325] sm:$0x8] %vm318, %v317
    %v327 = vld [vmem:[#allocation0] sm:$0xf]
    %328 = vrot.lane.b32.xlu0 %v327, 101
    %v329 = vpop.permute.xlu0 %328
    %vm330 = vcmask 7168
    %s331 = scalar_lea.vmem %s1, 27
    %332 = vst.msk [vmem:[%s331] sm:$0x1] %vm330, %v329
    %s333 = scalar_lea.vmem %s1, 58
    %334 = vst.msk [vmem:[%s333] sm:$0x2] %vm330, %v329
    %s335 = scalar_lea.vmem %s1, 89
    %336 = vst.msk [vmem:[%s335] sm:$0x4] %vm330, %v329
    %s337 = scalar_lea.vmem %s1, 120
    %338 = vst.msk [vmem:[%s337] sm:$0x8] %vm330, %v329
    %v339 = vld [vmem:[#allocation0] sm:$0xf]
    %340 = vrot.lane.b32.xlu0 %v339, 100
    %v341 = vpop.permute.xlu0 %340
    %vm342 = vcmask 7168
    %s343 = scalar_lea.vmem %s1, 28
    %344 = vst.msk [vmem:[%s343] sm:$0x1] %vm342, %v341
    %s345 = scalar_lea.vmem %s1, 59
    %346 = vst.msk [vmem:[%s345] sm:$0x2] %vm342, %v341
    %s347 = scalar_lea.vmem %s1, 90
    %348 = vst.msk [vmem:[%s347] sm:$0x4] %vm342, %v341
    %s349 = scalar_lea.vmem %s1, 121
    %350 = vst.msk [vmem:[%s349] sm:$0x8] %vm342, %v341
    %v351 = vld [vmem:[#allocation0] sm:$0xf]
    %352 = vrot.lane.b32.xlu0 %v351, 99
    %v353 = vpop.permute.xlu0 %352
    %vm354 = vcmask 7168
    %s355 = scalar_lea.vmem %s1, 29
    %356 = vst.msk [vmem:[%s355] sm:$0x1] %vm354, %v353
    %s357 = scalar_lea.vmem %s1, 60
    %358 = vst.msk [vmem:[%s357] sm:$0x2] %vm354, %v353
    %s359 = scalar_lea.vmem %s1, 91
    %360 = vst.msk [vmem:[%s359] sm:$0x4] %vm354, %v353
    %s361 = scalar_lea.vmem %s1, 122
    %362 = vst.msk [vmem:[%s361] sm:$0x8] %vm354, %v353
    %v363 = vld [vmem:[#allocation0] sm:$0xf]
    %364 = vrot.lane.b32.xlu0 %v363, 98
    %v365 = vpop.permute.xlu0 %364
    %vm366 = vcmask 7168
    %s367 = scalar_lea.vmem %s1, 30
    %368 = vst.msk [vmem:[%s367] sm:$0x1] %vm366, %v365
    %s369 = scalar_lea.vmem %s1, 61
    %370 = vst.msk [vmem:[%s369] sm:$0x2] %vm366, %v365
    %s371 = scalar_lea.vmem %s1, 92
    %372 = vst.msk [vmem:[%s371] sm:$0x4] %vm366, %v365
    %s373 = scalar_lea.vmem %s1, 123
    %374 = vst.msk [vmem:[%s373] sm:$0x8] %vm366, %v365
    %v375 = vld [vmem:[#allocation0] sm:$0xf]
    %376 = vrot.lane.b32.xlu0 %v375, 97
    %v377 = vpop.permute.xlu0 %376
    %vm378 = vcmask 7168
    %s379 = scalar_lea.vmem %s1, 31
    %380 = vst.msk [vmem:[%s379] sm:$0x1] %vm378, %v377
    %s381 = scalar_lea.vmem %s1, 62
    %382 = vst.msk [vmem:[%s381] sm:$0x2] %vm378, %v377
    %s383 = scalar_lea.vmem %s1, 93
    %384 = vst.msk [vmem:[%s383] sm:$0x4] %vm378, %v377
    %s385 = scalar_lea.vmem %s1, 124
    %386 = vst.msk [vmem:[%s385] sm:$0x8] %vm378, %v377

// kernel: upconv2x2.1
$region0: #{upconv2x2.1}
  #allocation0 [shape = 'u32[]', space=smem, size = 0x4, offset = 0x4, fixed_abs, tag = 'smem constant byte address 0x4 - core index']
  #allocation1 [shape = 'u32[72,128]{1,0:T(1,128)}', space=vmem, size = 0x9000, scoped, tag = 'internal scratch']
  %s0 = inlined_call_operand.vmem [shape: f32[2,64,256], index: 0, kind: input, shape index: {}]
  %s1 = inlined_call_operand.vmem [shape: f32[128,64], index: 1, kind: input, shape index: {}]
  %s2 = inlined_call_operand.vmem [shape: f32[128,1], index: 2, kind: input, shape index: {}]
  %s3 = inlined_call_operand.vmem [shape: f32[2,128,256], index: 3, kind: output, shape index: {}]
  %s4 = sld [smem:[#allocation0]]
  $region117: #{upconv2x2.1} parent=0
    _
  %s6 = ssub.s32 1, %s4
  %s7 = scalar_select 0, %s6, %s4
  $region1: #{upconv2x2.1} parent=0
    #allocation2 [shape = 'u8[65536]{0}', space=vmem, size = 0x10000, scoped, tag = 'input window, operand 0']
    #allocation3 [shape = 'u8[131072]{0}', space=vmem, size = 0x20000, scoped, tag = 'output window, operand 0']
    loop: start=0, step=1, limit=6
    $region2: #{upconv2x2.1} parent=1 // loop_pre_header
      _
    $region3: #{upconv2x2.1} parent=1 // loop_header
      %s9 = sphi 0, %s13
      %p10 = scmp.ge.s32.totalorder %s9, 6
      %s16 = sphi 0, %s28
      %s17 = sphi 0, %s24
      %s18 = sphi 0, %s16
      %s19 = sphi 0, %s17
      %s20 = sphi 0, %s18
      %s21 = sphi 0, %s19
      %s33 = sphi 0, %s35
      %s36 = sphi 0, %s33
      %s37 = sphi 0, %s36
      %s53 = sphi 0, %s37
      %s57 = sphi 0, %s57
      %s59 = sphi 0, %s57
      %s60 = sphi 0, %s59
      %s74 = sphi 0, %s60
      %s78 = sphi 0, %s78
      %s80 = sphi 0, %s78
      %s81 = sphi 0, %s80
      %s95 = sphi 0, %s81
      %s103 = sphi 0, %s105
      %s106 = sphi 0, %s103
      %s107 = sphi 0, %s106
      %s123 = sphi 0, %s107
    $region4: #{upconv2x2.1} parent=1 // loop_header_branch
      %12 = sbr.rel (%p10) target = $region8
    $region5: #{upconv2x2.1} parent=1 // loop_body
      %s14 = ssub.s32 %s9, 1
      %s15 = ssub.s32 %s9, 2
      %s22 = sadd.s32 1, %s17
      %p23 = scmp.ge.s32.totalorder %s22, 2
      %s24 = scalar_select %p23, 0, %s22
      %s25 = sadd.s32 1, %s16
      %s26 = scalar_select %p23, %s25, %s16
      %p27 = scmp.ge.s32.totalorder %s26, 2
      %s28 = scalar_select %p27, 0, %s26
      %s29 = ssub.s32 %s16, %s28
      %s30 = ssub.s32 %s17, %s24
      %s31 = sor.u32 %s29, %s30
      %p32 = scmp.eq.s32.totalorder %s31, 0
      %s34 = sadd.s32 %s33, 1
      %s35 = scalar_select %p32, %s33, %s34
      %p38 = pneg %p32
      %p39 = scmp.eq.s32.totalorder %s9, 3
      %p40 = por %p38, %p39
      %p41 = scmp.ne.s32.totalorder %s33, %s36
      %p42 = scmp.eq.s32.totalorder %s9, 0
      %p43 = por %p41, %p42
      %p44 = scmp.ne.s32.totalorder %s33, %s36
      %p45 = scmp.eq.s32.totalorder %s14, 3
      %p46 = por %p44, %p45
      %p47 = scmp.ne.s32.totalorder %s36, %s37
      %p48 = scmp.eq.s32.totalorder %s14, 0
      %p49 = por %p47, %p48
      %p50 = scmp.ne.s32.totalorder %s36, %s37
      %p51 = scmp.eq.s32.totalorder %s15, 3
      %p52 = por %p50, %p51
      %p54 = scmp.ne.s32.totalorder %s37, %s53
      %p55 = scmp.eq.s32.totalorder %s15, 0
      %p56 = por %p54, %p55
      %s58 = sadd.s32 %s57, 1
      %p61 = scmp.eq.s32.totalorder %s9, 3
      %p62 = scmp.ne.s32.totalorder %s57, %s59
      %p63 = scmp.eq.s32.totalorder %s9, 0
      %p64 = por %p62, %p63
      %p65 = scmp.ne.s32.totalorder %s57, %s59
      %p66 = scmp.eq.s32.totalorder %s14, 3
      %p67 = por %p65, %p66
      %p68 = scmp.ne.s32.totalorder %s59, %s60
      %p69 = scmp.eq.s32.totalorder %s14, 0
      %p70 = por %p68, %p69
      %p71 = scmp.ne.s32.totalorder %s59, %s60
      %p72 = scmp.eq.s32.totalorder %s15, 3
      %p73 = por %p71, %p72
      %p75 = scmp.ne.s32.totalorder %s60, %s74
      %p76 = scmp.eq.s32.totalorder %s15, 0
      %p77 = por %p75, %p76
      %s79 = sadd.s32 %s78, 1
      %p82 = scmp.eq.s32.totalorder %s9, 3
      %p83 = scmp.ne.s32.totalorder %s78, %s80
      %p84 = scmp.eq.s32.totalorder %s9, 0
      %p85 = por %p83, %p84
      %p86 = scmp.ne.s32.totalorder %s78, %s80
      %p87 = scmp.eq.s32.totalorder %s14, 3
      %p88 = por %p86, %p87
      %p89 = scmp.ne.s32.totalorder %s80, %s81
      %p90 = scmp.eq.s32.totalorder %s14, 0
      %p91 = por %p89, %p90
      %p92 = scmp.ne.s32.totalorder %s80, %s81
      %p93 = scmp.eq.s32.totalorder %s15, 3
      %p94 = por %p92, %p93
      %p96 = scmp.ne.s32.totalorder %s81, %s95
      %p97 = scmp.eq.s32.totalorder %s15, 0
      %p98 = por %p96, %p97
      %s99 = ssub.s32 %s16, %s28
      %s100 = ssub.s32 %s17, %s24
      %s101 = sor.u32 %s99, %s100
      %p102 = scmp.eq.s32.totalorder %s101, 0
      %s104 = sadd.s32 %s103, 1
      %s105 = scalar_select %p102, %s103, %s104
      %p108 = pneg %p102
      %p109 = scmp.eq.s32.totalorder %s9, 3
      %p110 = por %p108, %p109
      %p111 = scmp.ne.s32.totalorder %s103, %s106
      %p112 = scmp.eq.s32.totalorder %s9, 0
      %p113 = por %p111, %p112
      %p114 = scmp.ne.s32.totalorder %s103, %s106
      %p115 = scmp.eq.s32.totalorder %s14, 3
      %p116 = por %p114, %p115
      %p117 = scmp.ne.s32.totalorder %s106, %s107
      %p118 = scmp.eq.s32.totalorder %s14, 0
      %p119 = por %p117, %p118
      %p120 = scmp.ne.s32.totalorder %s106, %s107
      %p121 = scmp.eq.s32.totalorder %s15, 3
      %p122 = por %p120, %p121
      %p124 = scmp.ne.s32.totalorder %s107, %s123
      %p125 = scmp.eq.s32.totalorder %s15, 0
      %p126 = por %p124, %p125
      %p127 = scmp.le.s32.totalorder 1, %s9
      %p128 = scmp.lt.s32.totalorder %s9, 5
      %p129 = pnand %p127, %p128
      %p130 = pneg %p129
      // Predicated region
      $region9: #{upconv2x2.1} parent=5 // pred_check
        _
      $region10: #{upconv2x2.1} parent=5 // pred_check_branch
        %132 = sbr.rel (%p129) target = $region12
      $region11: #{upconv2x2.1} parent=5 // pred_region
        %s133 = ssub.s32 %s9, 1
        // Predicated region
        $region13: #{upconv2x2.1} parent=11 // pred_check
          %p134 = pneg %p70
        $region14: #{upconv2x2.1} parent=11 // pred_check_branch
          %136 = sbr.rel (%p134) target = $region16
        $region15: #{upconv2x2.1} parent=11 // pred_region
          _
        $region16: #{upconv2x2.1} parent=11 // pred_fallthru
          _
        // Predicated region
        $region17: #{upconv2x2.1} parent=11 // pred_check
          %p137 = pneg %p91
        $region18: #{upconv2x2.1} parent=11 // pred_check_branch
          %139 = sbr.rel (%p137) target = $region20
        $region19: #{upconv2x2.1} parent=11 // pred_region
          _
        $region20: #{upconv2x2.1} parent=11 // pred_fallthru
          _
      $region12: #{upconv2x2.1} parent=5 // pred_fallthru
        _
      %p140 = scmp.lt.s32.totalorder %s9, 4
      // Predicated region
      $region21: #{upconv2x2.1} parent=5 // pred_check
        %p141 = pneg %p140
      $region22: #{upconv2x2.1} parent=5 // pred_check_branch
        %143 = sbr.rel (%p141) target = $region24
      $region23: #{upconv2x2.1} parent=5 // pred_region
        // Predicated region
        $region25: #{upconv2x2.1} parent=23 // pred_check
          %p144 = pneg %p43
        $region26: #{upconv2x2.1} parent=23 // pred_check_branch
          %146 = sbr.rel (%p144) target = $region28
        $region27: #{upconv2x2.1} parent=23 // pred_region
          %s147 = sand.u32 %s33, 1
          %s148 = sand.u32 %s33, 1
          %s149 = smul.addr %s148, 64
          %s150 = scalar_lea.vmem [#allocation2], %s149
          %s151 = smul.addr %s16, 16
          %s152 = sadd.s32 %s17, %s151
          %s153 = smul.addr %s152, 8
          %s154 = scalar_lea.vmem %s0, %s153
          // Predicated region
          $region29: #{upconv2x2.1} parent=27 // pred_check
            _
          $region30: #{upconv2x2.1} parent=27 // pred_check_branch
            %156 = sbr.rel (0) target = $region32
          $region31: #{upconv2x2.1} parent=27 // pred_region
            // Predicated region
            $region33: #{upconv2x2.1} parent=31 // pred_check
              _
            $region34: #{upconv2x2.1} parent=31 // pred_check_branch
              %158 = sbr.rel (0) target = $region36
            $region35: #{upconv2x2.1} parent=31 // pred_region
              // Predicated region
              $region48: #{upconv2x2.1} parent=35 // pred_check
                _
              $region49: #{upconv2x2.1} parent=35 // pred_check_branch
                %188 = sbr.rel (0) target = $region51
              $region50: #{upconv2x2.1} parent=35 // pred_region
                loop: start=0, step=1, limit=1
                $region52: #{upconv2x2.1} parent=50 // loop_pre_header
                  _
                $region53: #{upconv2x2.1} parent=50 // loop_header
                  %s190 = sphi 0, %s194
                  %p191 = scmp.ge.s32.totalorder %s190, 1
                  %s195 = sphi %s154, %s154
                  %s196 = sphi %s150, %s150
                $region54: #{upconv2x2.1} parent=50 // loop_header_branch
                  %193 = sbr.rel (%p191) target = $region58
                $region55: #{upconv2x2.1} parent=50 // loop_body
                  %v197 = vld [vmem:[%s195] sm:$0xff]
                  %198 = vst [vmem:[%s196] sm:$0xff] %v197
                  %v199 = vld [vmem:[%s195 + $0x10] sm:$0xff]
                  %200 = vst [vmem:[%s196 + $0x8] sm:$0xff] %v199
                  %v201 = vld [vmem:[%s195 + $0x20] sm:$0xff]
                  %202 = vst [vmem:[%s196 + $0x10] sm:$0xff] %v201
                  %v203 = vld [vmem:[%s195 + $0x30] sm:$0xff]
                  %204 = vst [vmem:[%s196 + $0x18] sm:$0xff] %v203
                  %v205 = vld [vmem:[%s195 + $0x40] sm:$0xff]
                  %206 = vst [vmem:[%s196 + $0x20] sm:$0xff] %v205
                  %v207 = vld [vmem:[%s195 + $0x50] sm:$0xff]
                  %208 = vst [vmem:[%s196 + $0x28] sm:$0xff] %v207
                  %v209 = vld [vmem:[%s195 + $0x60] sm:$0xff]
                  %210 = vst [vmem:[%s196 + $0x30] sm:$0xff] %v209
                  %v211 = vld [vmem:[%s195 + $0x70] sm:$0xff]
                  %212 = vst [vmem:[%s196 + $0x38] sm:$0xff] %v211
                $region56: #{upconv2x2.1} parent=50 // loop_footer
                  %s194 = sadd.s32 1, %s190
                $region57: #{upconv2x2.1} parent=50 // loop_footer_branch
                  %189 = sbr.rel target = $region53
                $region58: #{upconv2x2.1} parent=50 // loop_exit
                  _
              $region51: #{upconv2x2.1} parent=35 // pred_fallthru
                _
              // Predicated region
              $region59: #{upconv2x2.1} parent=35 // pred_check
                _
              $region60: #{upconv2x2.1} parent=35 // pred_check_branch
                %214 = sbr.rel target = $region62
              $region61: #{upconv2x2.1} parent=35 // pred_region
                _
              $region62: #{upconv2x2.1} parent=35 // pred_fallthru
                _
            $region36: #{upconv2x2.1} parent=31 // pred_fallthru
              _
            // Predicated region
            $region37: #{upconv2x2.1} parent=31 // pred_check
              _
            $region38: #{upconv2x2.1} parent=31 // pred_check_branch
              %160 = sbr.rel target = $region40
            $region39: #{upconv2x2.1} parent=31 // pred_region
              %s162 = ssub.s32 256, 1
              loop: start=0, step=1, limit=1
              $region41: #{upconv2x2.1} parent=39 // loop_pre_header
                _
              $region42: #{upconv2x2.1} parent=39 // loop_header
                %s164 = sphi 0, %s168
                %p165 = scmp.ge.s32.totalorder %s164, 1
                %s169 = sphi %s154, %s154
                %s170 = sphi %s150, %s150
              $region43: #{upconv2x2.1} parent=39 // loop_header_branch
                %167 = sbr.rel (%p165) target = $region47
              $region44: #{upconv2x2.1} parent=39 // loop_body
                %v171 = vld [vmem:[%s169] sm:%s162]
                %172 = vst [vmem:[%s170] sm:%s162] %v171
                %v173 = vld [vmem:[%s169 + $0x10] sm:%s162]
                %174 = vst [vmem:[%s170 + $0x8] sm:%s162] %v173
                %v175 = vld [vmem:[%s169 + $0x20] sm:%s162]
                %176 = vst [vmem:[%s170 + $0x10] sm:%s162] %v175
                %v177 = vld [vmem:[%s169 + $0x30] sm:%s162]
                %178 = vst [vmem:[%s170 + $0x18] sm:%s162] %v177
                %v179 = vld [vmem:[%s169 + $0x40] sm:%s162]
                %180 = vst [vmem:[%s170 + $0x20] sm:%s162] %v179
                %v181 = vld [vmem:[%s169 + $0x50] sm:%s162]
                %182 = vst [vmem:[%s170 + $0x28] sm:%s162] %v181
                %v183 = vld [vmem:[%s169 + $0x60] sm:%s162]
                %184 = vst [vmem:[%s170 + $0x30] sm:%s162] %v183
                %v185 = vld [vmem:[%s169 + $0x70] sm:%s162]
                %186 = vst [vmem:[%s170 + $0x38] sm:%s162] %v185
              $region45: #{upconv2x2.1} parent=39 // loop_footer
                %s168 = sadd.s32 1, %s164
              $region46: #{upconv2x2.1} parent=39 // loop_footer_branch
                %163 = sbr.rel target = $region42
              $region47: #{upconv2x2.1} parent=39 // loop_exit
                _
            $region40: #{upconv2x2.1} parent=31 // pred_fallthru
              _
          $region32: #{upconv2x2.1} parent=27 // pred_fallthru
            _
          %215 = vnop
        $region28: #{upconv2x2.1} parent=23 // pred_fallthru
          _
      $region24: #{upconv2x2.1} parent=5 // pred_fallthru
        _
      %p216 = scmp.le.s32.totalorder 1, %s9
      %p217 = scmp.lt.s32.totalorder %s9, 5
      %p218 = pnand %p216, %p217
      %p219 = pneg %p218
      // Predicated region
      $region63: #{upconv2x2.1} parent=5 // pred_check
        _
      $region64: #{upconv2x2.1} parent=5 // pred_check_branch
        %221 = sbr.rel (%p218) target = $region66
      $region65: #{upconv2x2.1} parent=5 // pred_region
        %s222 = ssub.s32 %s9, 1
        %s223 = sand.u32 %s36, 1
        %s224 = sand.u32 %s36, 1
        %s225 = smul.addr %s224, 64
        %s226 = scalar_lea.vmem [#allocation2], %s225
        // Predicated region
        $region67: #{upconv2x2.1} parent=65 // pred_check
          %p227 = pneg %p49
        $region68: #{upconv2x2.1} parent=65 // pred_check_branch
          %229 = sbr.rel (%p227) target = $region70
        $region69: #{upconv2x2.1} parent=65 // pred_region
          _
        $region70: #{upconv2x2.1} parent=65 // pred_fallthru
          _
        %s230 = sand.u32 %s36, 1
        %s231 = sand.u32 %s36, 1
        %s232 = smul.addr %s231, 64
        %s233 = scalar_lea.vmem [#allocation2], %s232
        %p234 = pneg %p49
        %p235 = pneg %p46
        %p236 = pneg %p70
        %p237 = pneg %p67
        %p238 = pneg %p91
        %p239 = pneg %p88
        %p240 = pneg %p119
        %p241 = pneg %p116
        %s242 = sand.u32 %s106, 1
        %s243 = sand.u32 %s106, 1
        %s244 = smul.addr %s243, 128
        %s245 = scalar_lea.vmem [#allocation3], %s244
        %v246 = vld [vmem:[%s1] sm:$0xff]
        %v247 = vld [vmem:[%s1 + $0x8] sm:$0xff]
        %v248 = vld [vmem:[%s1 + $0x10] sm:$0xff]
        %v249 = vld [vmem:[%s1 + $0x18] sm:$0xff]
        %v250 = vld [vmem:[%s1 + $0x20] sm:$0xff]
        %v251 = vld [vmem:[%s1 + $0x28] sm:$0xff]
        %v252 = vld [vmem:[%s1 + $0x30] sm:$0xff]
        %v253 = vld [vmem:[%s1 + $0x38] sm:$0xff]
        %v254 = vld [vmem:[%s1 + $0x40] sm:$0xff]
        %v255 = vld [vmem:[%s1 + $0x48] sm:$0xff]
        %v256 = vld [vmem:[%s1 + $0x50] sm:$0xff]
        %v257 = vld [vmem:[%s1 + $0x58] sm:$0xff]
        %v258 = vld [vmem:[%s1 + $0x60] sm:$0xff]
        %v259 = vld [vmem:[%s1 + $0x68] sm:$0xff]
        %v260 = vld [vmem:[%s1 + $0x70] sm:$0xff]
        %v261 = vld [vmem:[%s1 + $0x78] sm:$0xff]
        %v262 = vld [vmem:[%s226] sm:$0xff]
        %v263 = vld [vmem:[%s226 + $0x8] sm:$0xff]
        %v264 = vld [vmem:[%s226 + $0x10] sm:$0xff]
        %v265 = vld [vmem:[%s226 + $0x18] sm:$0xff]
        %v266 = vld [vmem:[%s226 + $0x20] sm:$0xff]
        %v267 = vld [vmem:[%s226 + $0x28] sm:$0xff]
        %v268 = vld [vmem:[%s226 + $0x30] sm:$0xff]
        %v269 = vld [vmem:[%s226 + $0x38] sm:$0xff]
        %v270 = vld [vmem:[%s2] sm:$0xff]
        %v271 = vld [vmem:[%s2 + $0x8] sm:$0xff]
        %v272 = vld [vmem:[%s2 + $0x10] sm:$0xff]
        %v273 = vld [vmem:[%s2 + $0x18] sm:$0xff]
        %v274 = vld [vmem:[%s2 + $0x20] sm:$0xff]
        %v275 = vld [vmem:[%s2 + $0x28] sm:$0xff]
        %v276 = vld [vmem:[%s2 + $0x30] sm:$0xff]
        %v277 = vld [vmem:[%s2 + $0x38] sm:$0xff]
        %v278 = vld [vmem:[%s2 + $0x40] sm:$0xff]
        %v279 = vld [vmem:[%s2 + $0x48] sm:$0xff]
        %v280 = vld [vmem:[%s2 + $0x50] sm:$0xff]
        %v281 = vld [vmem:[%s2 + $0x58] sm:$0xff]
        %v282 = vld [vmem:[%s2 + $0x60] sm:$0xff]
        %v283 = vld [vmem:[%s2 + $0x68] sm:$0xff]
        %v284 = vld [vmem:[%s2 + $0x70] sm:$0xff]
        %v285 = vld [vmem:[%s2 + $0x78] sm:$0xff]
        %287 = vset.pattern.permute.xlu0 0
        %288 = vperm.xlu0 %287, %v270
        %v289 = vpop.permute.xlu0 %288
        %292 = vset.pattern.permute.xlu0 0
        %293 = vperm.xlu0 %292, %v271
        %v294 = vpop.permute.xlu0 %293
        %297 = vset.pattern.permute.xlu0 0
        %298 = vperm.xlu0 %297, %v272
        %v299 = vpop.permute.xlu0 %298
        %302 = vset.pattern.permute.xlu0 0
        %303 = vperm.xlu0 %302, %v273
        %v304 = vpop.permute.xlu0 %303
        %307 = vset.pattern.permute.xlu0 0
        %308 = vperm.xlu0 %307, %v274
        %v309 = vpop.permute.xlu0 %308
        %312 = vset.pattern.permute.xlu0 0
        %313 = vperm.xlu0 %312, %v275
        %v314 = vpop.permute.xlu0 %313
        %317 = vset.pattern.permute.xlu0 0
        %318 = vperm.xlu0 %317, %v276
        %v319 = vpop.permute.xlu0 %318
        %322 = vset.pattern.permute.xlu0 0
        %323 = vperm.xlu0 %322, %v277
        %v324 = vpop.permute.xlu0 %323
        %327 = vset.pattern.permute.xlu0 0
        %328 = vperm.xlu0 %327, %v278
        %v329 = vpop.permute.xlu0 %328
        %332 = vset.pattern.permute.xlu0 0
        %333 = vperm.xlu0 %332, %v279
        %v334 = vpop.permute.xlu0 %333
        %337 = vset.pattern.permute.xlu0 0
        %338 = vperm.xlu0 %337, %v280
        %v339 = vpop.permute.xlu0 %338
        %342 = vset.pattern.permute.xlu0 0
        %343 = vperm.xlu0 %342, %v281
        %v344 = vpop.permute.xlu0 %343
        %347 = vset.pattern.permute.xlu0 0
        %348 = vperm.xlu0 %347, %v282
        %v349 = vpop.permute.xlu0 %348
        %352 = vset.pattern.permute.xlu0 0
        %353 = vperm.xlu0 %352, %v283
        %v354 = vpop.permute.xlu0 %353
        %357 = vset.pattern.permute.xlu0 0
        %358 = vperm.xlu0 %357, %v284
        %v359 = vpop.permute.xlu0 %358
        %362 = vset.pattern.permute.xlu0 0
        %363 = vperm.xlu0 %362, %v285
        %v364 = vpop.permute.xlu0 %363
        %vm366 = vcmask 523264
        %v368 = vsel %vm366, %v246, 0
        %v371 = vsel %vm366, %v247, 0
        %v374 = vsel %vm366, %v248, 0
        %v377 = vsel %vm366, %v249, 0
        %v380 = vsel %vm366, %v250, 0
        %v383 = vsel %vm366, %v251, 0
        %v386 = vsel %vm366, %v252, 0
        %v389 = vsel %vm366, %v253, 0
        %v392 = vsel %vm366, %v254, 0
        %v395 = vsel %vm366, %v255, 0
        %v398 = vsel %vm366, %v256, 0
        %v401 = vsel %vm366, %v257, 0
        %v404 = vsel %vm366, %v258, 0
        %v407 = vsel %vm366, %v259, 0
        %v410 = vsel %vm366, %v260, 0
        %v413 = vsel %vm366, %v261, 0
        %415 = vmatpush.msra.mxu0 0.0
        %416 = vmatpush.msra.mxu0 0.0
        %417 = vmatpush.msra.mxu0 0.0
        %418 = vmatpush.msra.mxu0 0.0
        %419 = vmatpush.msra.mxu0 0.0
        %420 = vmatpush.msra.mxu0 0.0
        %421 = vmatpush.msra.mxu0 0.0
        %422 = vmatpush.msra.mxu0 0.0
        %423 = vmatpush.msra.mxu0 %v269
        %424 = vmatpush.msra.mxu0 %v268
        %425 = vmatpush.msra.mxu0 %v267
        %426 = vmatpush.msra.mxu0 %v266
        %427 = vmatpush.msra.mxu0 %v265
        %428 = vmatpush.msra.mxu0 %v264
        %429 = vmatpush.msra.mxu0 %v263
        %430 = vmatpush.msra.mxu0 %v262
        %431 = vmatmul.f32.gmra.mxu0 %v368
        %v432 = vpop.f32.mrf.mxu0
        %v433 = vadd.f32 %v289, %v432
        %434 = vmatmul.f32.gmra.mxu0 %v371
        %v435 = vpop.f32.mrf.mxu0
        %v436 = vadd.f32 %v294, %v435
        %437 = vmatmul.f32.gmra.mxu0 %v374
        %v438 = vpop.f32.mrf.mxu0
        %v439 = vadd.f32 %v299, %v438
        %440 = vmatmul.f32.gmra.mxu0 %v377
        %v441 = vpop.f32.mrf.mxu0
        %v442 = vadd.f32 %v304, %v441
        %443 = vmatmul.f32.gmra.mxu0 %v380
        %v444 = vpop.f32.mrf.mxu0
        %v445 = vadd.f32 %v309, %v444
        %446 = vmatmul.f32.gmra.mxu0 %v383
        %v447 = vpop.f32.mrf.mxu0
        %v448 = vadd.f32 %v314, %v447
        %449 = vmatmul.f32.gmra.mxu0 %v386
        %v450 = vpop.f32.mrf.mxu0
        %v451 = vadd.f32 %v319, %v450
        %452 = vmatmul.f32.gmra.mxu0 %v389
        %v453 = vpop.f32.mrf.mxu0
        %v454 = vadd.f32 %v324, %v453
        %455 = vmatmul.f32.gmra.mxu0 %v392
        %v456 = vpop.f32.mrf.mxu0
        %v457 = vadd.f32 %v329, %v456
        %458 = vmatmul.f32.gmra.mxu0 %v395
        %v459 = vpop.f32.mrf.mxu0
        %v460 = vadd.f32 %v334, %v459
        %461 = vmatmul.f32.gmra.mxu0 %v398
        %v462 = vpop.f32.mrf.mxu0
        %v463 = vadd.f32 %v339, %v462
        %464 = vmatmul.f32.gmra.mxu0 %v401
        %v465 = vpop.f32.mrf.mxu0
        %v466 = vadd.f32 %v344, %v465
        %467 = vmatmul.f32.gmra.mxu0 %v404
        %v468 = vpop.f32.mrf.mxu0
        %v469 = vadd.f32 %v349, %v468
        %470 = vmatmul.f32.gmra.mxu0 %v407
        %v471 = vpop.f32.mrf.mxu0
        %v472 = vadd.f32 %v354, %v471
        %473 = vmatmul.f32.gmra.mxu0 %v410
        %v474 = vpop.f32.mrf.mxu0
        %v475 = vadd.f32 %v359, %v474
        %476 = vmatmul.f32.gmra.mxu0 %v413
        %v477 = vpop.f32.mrf.mxu0
        %v478 = vadd.f32 %v364, %v477
        %479 = vdwg.mxu0
        %480 = vst [vmem:[%s245] sm:$0xff] %v433
        %481 = vst [vmem:[%s245 + $0x8] sm:$0xff] %v436
        %482 = vst [vmem:[%s245 + $0x10] sm:$0xff] %v439
        %483 = vst [vmem:[%s245 + $0x18] sm:$0xff] %v442
        %484 = vst [vmem:[%s245 + $0x20] sm:$0xff] %v445
        %485 = vst [vmem:[%s245 + $0x28] sm:$0xff] %v448
        %486 = vst [vmem:[%s245 + $0x30] sm:$0xff] %v451
        %487 = vst [vmem:[%s245 + $0x38] sm:$0xff] %v454
        %488 = vst [vmem:[%s245 + $0x40] sm:$0xff] %v457
        %489 = vst [vmem:[%s245 + $0x48] sm:$0xff] %v460
        %490 = vst [vmem:[%s245 + $0x50] sm:$0xff] %v463
        %491 = vst [vmem:[%s245 + $0x58] sm:$0xff] %v466
        %492 = vst [vmem:[%s245 + $0x60] sm:$0xff] %v469
        %493 = vst [vmem:[%s245 + $0x68] sm:$0xff] %v472
        %494 = vst [vmem:[%s245 + $0x70] sm:$0xff] %v475
        %495 = vst [vmem:[%s245 + $0x78] sm:$0xff] %v478
        %s496 = sand.u32 %s106, 1
        %s497 = sand.u32 %s106, 1
        %s498 = smul.addr %s497, 128
        %s499 = scalar_lea.vmem [#allocation3], %s498
        // Predicated region
        $region71: #{upconv2x2.1} parent=65 // pred_check
          %p500 = pneg %p116
        $region72: #{upconv2x2.1} parent=65 // pred_check_branch
          %502 = sbr.rel (%p500) target = $region74
        $region73: #{upconv2x2.1} parent=65 // pred_region
          %s503 = smul.addr %s18, 32
          %s504 = sadd.s32 %s19, %s503
          %s505 = smul.addr %s504, 8
          %s506 = scalar_lea.vmem %s3, %s505
          // Predicated region
          $region75: #{upconv2x2.1} parent=73 // pred_check
            _
          $region76: #{upconv2x2.1} parent=73 // pred_check_branch
            %508 = sbr.rel (0) target = $region78
          $region77: #{upconv2x2.1} parent=73 // pred_region
            // Predicated region
            $region79: #{upconv2x2.1} parent=77 // pred_check
              _
            $region80: #{upconv2x2.1} parent=77 // pred_check_branch
              %510 = sbr.rel (0) target = $region82
            $region81: #{upconv2x2.1} parent=77 // pred_region
              // Predicated region
              $region94: #{upconv2x2.1} parent=81 // pred_check
                _
              $region95: #{upconv2x2.1} parent=81 // pred_check_branch
                %556 = sbr.rel (0) target = $region97
              $region96: #{upconv2x2.1} parent=81 // pred_region
                loop: start=0, step=1, limit=1
                $region98: #{upconv2x2.1} parent=96 // loop_pre_header
                  _
                $region99: #{upconv2x2.1} parent=96 // loop_header
                  %s558 = sphi 0, %s562
                  %p559 = scmp.ge.s32.totalorder %s558, 1
                  %s563 = sphi %s499, %s499
                  %s564 = sphi %s506, %s506
                $region100: #{upconv2x2.1} parent=96 // loop_header_branch
                  %561 = sbr.rel (%p559) target = $region104
                $region101: #{upconv2x2.1} parent=96 // loop_body
                  %v565 = vld [vmem:[%s563] sm:$0xff]
                  %566 = vst [vmem:[%s564] sm:$0xff] %v565
                  %v567 = vld [vmem:[%s563 + $0x8] sm:$0xff]
                  %568 = vst [vmem:[%s564 + $0x10] sm:$0xff] %v567
                  %v569 = vld [vmem:[%s563 + $0x10] sm:$0xff]
                  %570 = vst [vmem:[%s564 + $0x20] sm:$0xff] %v569
                  %v571 = vld [vmem:[%s563 + $0x18] sm:$0xff]
                  %572 = vst [vmem:[%s564 + $0x30] sm:$0xff] %v571
                  %v573 = vld [vmem:[%s563 + $0x20] sm:$0xff]
                  %574 = vst [vmem:[%s564 + $0x40] sm:$0xff] %v573
                  %v575 = vld [vmem:[%s563 + $0x28] sm:$0xff]
                  %576 = vst [vmem:[%s564 + $0x50] sm:$0xff] %v575
                  %v577 = vld [vmem:[%s563 + $0x30] sm:$0xff]
                  %578 = vst [vmem:[%s564 + $0x60] sm:$0xff] %v577
                  %v579 = vld [vmem:[%s563 + $0x38] sm:$0xff]
                  %580 = vst [vmem:[%s564 + $0x70] sm:$0xff] %v579
                  %v581 = vld [vmem:[%s563 + $0x40] sm:$0xff]
                  %582 = vst [vmem:[%s564 + $0x80] sm:$0xff] %v581
                  %v583 = vld [vmem:[%s563 + $0x48] sm:$0xff]
                  %584 = vst [vmem:[%s564 + $0x90] sm:$0xff] %v583
                  %v585 = vld [vmem:[%s563 + $0x50] sm:$0xff]
                  %586 = vst [vmem:[%s564 + $0xa0] sm:$0xff] %v585
                  %v587 = vld [vmem:[%s563 + $0x58] sm:$0xff]
                  %588 = vst [vmem:[%s564 + $0xb0] sm:$0xff] %v587
                  %v589 = vld [vmem:[%s563 + $0x60] sm:$0xff]
                  %590 = vst [vmem:[%s564 + $0xc0] sm:$0xff] %v589
                  %v591 = vld [vmem:[%s563 + $0x68] sm:$0xff]
                  %592 = vst [vmem:[%s564 + $0xd0] sm:$0xff] %v591
                  %v593 = vld [vmem:[%s563 + $0x70] sm:$0xff]
                  %594 = vst [vmem:[%s564 + $0xe0] sm:$0xff] %v593
                  %v595 = vld [vmem:[%s563 + $0x78] sm:$0xff]
                  %596 = vst [vmem:[%s564 + $0xf0] sm:$0xff] %v595
                $region102: #{upconv2x2.1} parent=96 // loop_footer
                  %s562 = sadd.s32 1, %s558
                $region103: #{upconv2x2.1} parent=96 // loop_footer_branch
                  %557 = sbr.rel target = $region99
                $region104: #{upconv2x2.1} parent=96 // loop_exit
                  _
              $region97: #{upconv2x2.1} parent=81 // pred_fallthru
                _
              // Predicated region
              $region105: #{upconv2x2.1} parent=81 // pred_check
                _
              $region106: #{upconv2x2.1} parent=81 // pred_check_branch
                %598 = sbr.rel target = $region108
              $region107: #{upconv2x2.1} parent=81 // pred_region
                _
              $region108: #{upconv2x2.1} parent=81 // pred_fallthru
                _
            $region82: #{upconv2x2.1} parent=77 // pred_fallthru
              _
            // Predicated region
            $region83: #{upconv2x2.1} parent=77 // pred_check
              _
            $region84: #{upconv2x2.1} parent=77 // pred_check_branch
              %512 = sbr.rel target = $region86
            $region85: #{upconv2x2.1} parent=77 // pred_region
              %s514 = ssub.s32 256, 1
              loop: start=0, step=1, limit=1
              $region87: #{upconv2x2.1} parent=85 // loop_pre_header
                _
              $region88: #{upconv2x2.1} parent=85 // loop_header
                %s516 = sphi 0, %s520
                %p517 = scmp.ge.s32.totalorder %s516, 1
                %s521 = sphi %s499, %s499
                %s522 = sphi %s506, %s506
              $region89: #{upconv2x2.1} parent=85 // loop_header_branch
                %519 = sbr.rel (%p517) target = $region93
              $region90: #{upconv2x2.1} parent=85 // loop_body
                %v523 = vld [vmem:[%s521] sm:%s514]
                %524 = vst [vmem:[%s522] sm:%s514] %v523
                %v525 = vld [vmem:[%s521 + $0x8] sm:%s514]
                %526 = vst [vmem:[%s522 + $0x10] sm:%s514] %v525
                %v527 = vld [vmem:[%s521 + $0x10] sm:%s514]
                %528 = vst [vmem:[%s522 + $0x20] sm:%s514] %v527
                %v529 = vld [vmem:[%s521 + $0x18] sm:%s514]
                %530 = vst [vmem:[%s522 + $0x30] sm:%s514] %v529
                %v531 = vld [vmem:[%s521 + $0x20] sm:%s514]
                %532 = vst [vmem:[%s522 + $0x40] sm:%s514] %v531
                %v533 = vld [vmem:[%s521 + $0x28] sm:%s514]
                %534 = vst [vmem:[%s522 + $0x50] sm:%s514] %v533
                %v535 = vld [vmem:[%s521 + $0x30] sm:%s514]
                %536 = vst [vmem:[%s522 + $0x60] sm:%s514] %v535
                %v537 = vld [vmem:[%s521 + $0x38] sm:%s514]
                %538 = vst [vmem:[%s522 + $0x70] sm:%s514] %v537
                %v539 = vld [vmem:[%s521 + $0x40] sm:%s514]
                %540 = vst [vmem:[%s522 + $0x80] sm:%s514] %v539
                %v541 = vld [vmem:[%s521 + $0x48] sm:%s514]
                %542 = vst [vmem:[%s522 + $0x90] sm:%s514] %v541
                %v543 = vld [vmem:[%s521 + $0x50] sm:%s514]
                %544 = vst [vmem:[%s522 + $0xa0] sm:%s514] %v543
                %v545 = vld [vmem:[%s521 + $0x58] sm:%s514]
                %546 = vst [vmem:[%s522 + $0xb0] sm:%s514] %v545
                %v547 = vld [vmem:[%s521 + $0x60] sm:%s514]
                %548 = vst [vmem:[%s522 + $0xc0] sm:%s514] %v547
                %v549 = vld [vmem:[%s521 + $0x68] sm:%s514]
                %550 = vst [vmem:[%s522 + $0xd0] sm:%s514] %v549
                %v551 = vld [vmem:[%s521 + $0x70] sm:%s514]
                %552 = vst [vmem:[%s522 + $0xe0] sm:%s514] %v551
                %v553 = vld [vmem:[%s521 + $0x78] sm:%s514]
                %554 = vst [vmem:[%s522 + $0xf0] sm:%s514] %v553
              $region91: #{upconv2x2.1} parent=85 // loop_footer
                %s520 = sadd.s32 1, %s516
              $region92: #{upconv2x2.1} parent=85 // loop_footer_branch
                %515 = sbr.rel target = $region88
              $region93: #{upconv2x2.1} parent=85 // loop_exit
                _
            $region86: #{upconv2x2.1} parent=77 // pred_fallthru
              _
          $region78: #{upconv2x2.1} parent=73 // pred_fallthru
            _
          %599 = vnop
        $region74: #{upconv2x2.1} parent=65 // pred_fallthru
          _
      $region66: #{upconv2x2.1} parent=5 // pred_fallthru
        _
      %p600 = scmp.le.s32.totalorder 2, %s9
      // Predicated region
      $region109: #{upconv2x2.1} parent=5 // pred_check
        %p601 = pneg %p600
      $region110: #{upconv2x2.1} parent=5 // pred_check_branch
        %603 = sbr.rel (%p601) target = $region112
      $region111: #{upconv2x2.1} parent=5 // pred_region
        %s604 = ssub.s32 %s9, 2
        // Predicated region
        $region113: #{upconv2x2.1} parent=111 // pred_check
          %p605 = pneg %p122
        $region114: #{upconv2x2.1} parent=111 // pred_check_branch
          %607 = sbr.rel (%p605) target = $region116
        $region115: #{upconv2x2.1} parent=111 // pred_region
          %s608 = sand.u32 %s107, 1
          %s609 = sand.u32 %s107, 1
          %s610 = smul.addr %s609, 128
          %s611 = scalar_lea.vmem [#allocation3], %s610
        $region116: #{upconv2x2.1} parent=111 // pred_fallthru
          _
      $region112: #{upconv2x2.1} parent=5 // pred_fallthru
        _
    $region6: #{upconv2x2.1} parent=1 // loop_footer
      %s13 = sadd.s32 1, %s9
    $region7: #{upconv2x2.1} parent=1 // loop_footer_branch
      %8 = sbr.rel target = $region3
    $region8: #{upconv2x2.1} parent=1 // loop_exit
      _

</llo_original>
